<compile_context>
chip_gen: v7x
topology: tpu7x:2x2x1
jax: 0.10.0
libtpu: 0.0.40
codegen_flags: <defaults>
</compile_context>

<pallas_src>
import functools
import math

import jax
import jax.numpy as jnp
from jax.experimental import pallas as pl
from jax.experimental.pallas import tpu as pltpu


LANE = 128
SUBLANE = 8
E_PAR = 2          # edge-axis partitions -> leading "parallel" grid axis (v7x: 1/TC)


def _round_up(a, b):
    return ((a + b - 1) // b) * b


def _cdiv(a, b):
    return (a + b - 1) // b


def _vmem_limit_bytes():
    """Per-generation scoped-VMEM budget (v4/v5e/v6e: 128 MiB physical, v7x: 64 MiB)."""
    try:
        kind = jax.devices()[0].device_kind.lower()
    except Exception:
        kind = ""
    if ("v4" in kind) or ("v5" in kind) or ("v6" in kind):
        return 96 * 1024 * 1024
    return 48 * 1024 * 1024


def _pick_tile_and_pad(n, max_tile):
    """Full block when small, else pad to a multiple of max_tile."""
    if n <= max_tile:
        return n, n
    return _round_up(n, max_tile), max_tile


def _pick_edge_tiling(E, n_parts, N_pad, D_pad, max_tile, vmem_bytes):
    """Choose kernel-1's edge tile so its VMEM footprint stays within budget."""
    # resident across the edge axis: double-buffered Q (N,D) + KV (N,2D) + head_block
    # (D,D) plus the (1,N,D) f32 accumulator block (x2 output buffers).
    resident = (2 * 3 * N_pad * D_pad + 2 * D_pad * D_pad + 2 * N_pad * D_pad) * 4
    # per edge row: two f32 one-hot rows (N_pad lanes) + gathered q/kv/msg working set.
    per_row = (2 * N_pad + 12 * D_pad) * 4
    cap = max(vmem_bytes - resident, 0) // per_row
    cap = max(SUBLANE, (cap // SUBLANE) * SUBLANE)
    per_part = max(1, _cdiv(E, n_parts))
    te = min(max_tile, cap, _round_up(per_part, SUBLANE))
    te = max(SUBLANE, (te // SUBLANE) * SUBLANE)
    n_tiles = _cdiv(per_part, te)
    return te, n_tiles, n_parts * n_tiles * te


# ---------------------------------------------------------------------------
# Kernel 0: fused Q/KV projection, tiled over nodes ("parallel").
# ---------------------------------------------------------------------------
def qkv_kernel(x_ref, w_ref, q_ref, kv_ref, *, d_pad, mxu_dtype):
    qkv = jnp.dot(x_ref[...].astype(mxu_dtype), w_ref[...].astype(mxu_dtype),
                  preferred_element_type=jnp.float32)          # (tN, 3*D) in one matmul
    q_ref[...] = qkv[:, :d_pad].astype(q_ref.dtype)
    kv_ref[...] = qkv[:, d_pad:].astype(kv_ref.dtype)


# ---------------------------------------------------------------------------
# Kernel 1: per-edge attention, grid = (E_PAR parallel, edge tiles arbitrary).
# Each partition owns its own resident (1, N, D) accumulator block.
# ---------------------------------------------------------------------------
def edge_attn_kernel(src_ref, dst_ref, ew_ref, q_ref, kv_ref, hb_ref, out_ref,
                     *, mxu_dtype):
    e = pl.program_id(1)
    te = src_ref.shape[0]
    n_pad = q_ref.shape[0]
    d_pad = q_ref.shape[1]

    # One-hot gather matrices built in-kernel from int32 indices.  Padded edges carry
    # the sentinel index n_pad which never matches the iota -> all-zero rows (no-op).
    node_iota = jax.lax.broadcasted_iota(jnp.int32, (te, n_pad), 1)
    src_oh = (src_ref[...] == node_iota).astype(mxu_dtype)                 # (tE, N)
    dst_oh = (dst_ref[...] == node_iota).astype(mxu_dtype)                 # (tE, N)

    q_i = jnp.dot(src_oh, q_ref[...].astype(mxu_dtype),
                  preferred_element_type=jnp.float32)                      # (tE, D)
    kv_j = jnp.dot(dst_oh, kv_ref[...].astype(mxu_dtype),
                   preferred_element_type=jnp.float32)                     # (tE, 2D)
    k_j = kv_j[:, :d_pad]
    v_j = kv_j[:, d_pad:]

    # Per-head reduce + broadcast back to feature width via a scaled block-diagonal
    # (D,D) matmul (1/sqrt(d_head) folded in).
    score_full = jnp.dot((q_i * k_j).astype(mxu_dtype), hb_ref[...].astype(mxu_dtype),
                         preferred_element_type=jnp.float32)               # (tE, D)
    msg = v_j * score_full * ew_ref[...]                                   # (tE, D)

    # Scatter-add over destination nodes: contract the edge dimension.
    contrib = jax.lax.dot_general(
        dst_oh, msg.astype(mxu_dtype),
        dimension_numbers=(((0,), (0,)), ((), ())),
        preferred_element_type=jnp.float32)                                # (N, D)

    @pl.when(e == 0)
    def _():
        out_ref[...] = jnp.zeros_like(out_ref)

    out_ref[...] += contrib[None]


# ---------------------------------------------------------------------------
# Kernel 2: node-wise epilogue — partial-sum + inv_deg mean + w_o + LN1 + FFN + LN2,
# tiled over nodes ("parallel").  LayerNorm stats are masked to the real d_model.
# ---------------------------------------------------------------------------
def node_epilogue_kernel(x_ref, agg_ref, invdeg_ref,
                         wo_ref, bo_ref, w1_ref, b1_ref, w2_ref, b2_ref,
                         g1_ref, bt1_ref, g2_ref, bt2_ref,
                         out_ref, *, eps, d_model, mxu_dtype):
    x = x_ref[...]

    # sum over the edge partitions, then mean over incoming edges.
    agg = agg_ref[0].astype(jnp.float32)
    for p in range(1, agg_ref.shape[0]):
        agg = agg + agg_ref[p].astype(jnp.float32)
    agg = agg * invdeg_ref[...]

    attn = jnp.dot(agg.astype(mxu_dtype), wo_ref[...].astype(mxu_dtype),
                   preferred_element_type=jnp.float32) + bo_ref[...]

    lane = jax.lax.broadcasted_iota(jnp.int32, x.shape, 1)
    mask = (lane < d_model).astype(jnp.float32)
    inv_d = 1.0 / d_model

    def masked_ln(v, g, b):
        mu = jnp.sum(v * mask, axis=-1, keepdims=True) * inv_d
        diff = (v - mu) * mask
        var = jnp.sum(diff * diff, axis=-1, keepdims=True) * inv_d
        return (v - mu) * jax.lax.rsqrt(var + eps) * g + b

    h = masked_ln(x + attn, g1_ref[...], bt1_ref[...])

    ff = jnp.dot(h.astype(mxu_dtype), w1_ref[...].astype(mxu_dtype),
                 preferred_element_type=jnp.float32) + b1_ref[...]
    ff = jnp.maximum(ff, 0.0)
    ff = jnp.dot(ff.astype(mxu_dtype), w2_ref[...].astype(mxu_dtype),
                 preferred_element_type=jnp.float32) + b2_ref[...]

    out_ref[...] = masked_ln(h + ff, g2_ref[...], bt2_ref[...]).astype(out_ref.dtype)


# ---------------------------------------------------------------------------
# Wrapper
# ---------------------------------------------------------------------------
def graph_transformer_layer(x, edge_index, edge_attr, params, *, n_heads,
                            node_tile=512, edge_tile=1024, use_bf16=False):
    N, d_model = x.shape
    E = edge_index.shape[1]
    d_ff = params["w1"].shape[1]
    d_head = d_model // n_heads
    scale = 1.0 / math.sqrt(d_head)
    eps = 1e-5
    f32 = jnp.float32
    mxu_dtype = jnp.bfloat16 if use_bf16 else f32
    vmem_bytes = _vmem_limit_bytes()

    # lane-dense feature padding (masked LayerNorm keeps stats exact over d_model)
    D_pad = _round_up(d_model, LANE)
    F_pad = _round_up(d_ff, LANE)

    # ---- tiny wrapper-side precomputes ----
    src = edge_index[0].astype(jnp.int32)
    dst = edge_index[1].astype(jnp.int32)
    if edge_attr is None:
        ew = jnp.ones((E, 1), f32)
    else:
        ew = jax.nn.sigmoid(jnp.sum(edge_attr.astype(f32), axis=-1, keepdims=True))
    deg = jnp.zeros((N,), f32).at[dst].add(1.0)
    inv_deg = (1.0 / jnp.maximum(deg, 1.0)).reshape(N, 1)

    def pad2(a, r, c):
        a = a.astype(f32)
        return jnp.pad(a, ((0, r - a.shape[0]), (0, c - a.shape[1])))

    # fused QKV projection weight -> one wide MXU matmul in kernel 0.
    w_qkv = jnp.concatenate([pad2(params["wq"], D_pad, D_pad),
                             pad2(params["wk"], D_pad, D_pad),
                             pad2(params["wv"], D_pad, D_pad)], axis=1)
    # scaled block-diagonal per-head mask (real block-diag in top-left, zeros elsewhere).
    hb = jnp.kron(jnp.eye(n_heads, dtype=f32), jnp.ones((d_head, d_head), f32)) * scale
    head_block = pad2(hb, D_pad, D_pad)

    wo = pad2(params["wo"], D_pad, D_pad)
    bo = pad2(params["bo"], 1, D_pad)
    w1 = pad2(params["w1"], D_pad, F_pad)
    b1 = pad2(params["b1"], 1, F_pad)
    w2 = pad2(params["w2"], F_pad, D_pad)
    b2 = pad2(params["b2"], 1, D_pad)
    g1 = pad2(params["g1"], 1, D_pad)
    bt1 = pad2(params["bt1"], 1, D_pad)
    g2 = pad2(params["g2"], 1, D_pad)
    bt2 = pad2(params["bt2"], 1, D_pad)

    if use_bf16:
        w_qkv = w_qkv.astype(mxu_dtype)
        head_block = head_block.astype(mxu_dtype)
        wo = wo.astype(mxu_dtype)
        w1 = w1.astype(mxu_dtype)
        w2 = w2.astype(mxu_dtype)

    # ---- tiling / padding ----
    N_pad, tN = _pick_tile_and_pad(N, node_tile)
    n_grid = N_pad // tN
    tE, n_e_tiles, E_pad = _pick_edge_tiling(E, E_PAR, N_pad, D_pad, edge_tile, vmem_bytes)

    x_p = pad2(x, N_pad, D_pad)
    inv_deg_p = jnp.pad(inv_deg, ((0, N_pad - N), (0, 0)), constant_values=1.0)
    # padded edges point at sentinel node N_pad -> all-zero one-hot row -> no-op.
    src_p = jnp.pad(src, (0, E_pad - E), constant_values=N_pad).reshape(E_pad, 1)
    dst_p = jnp.pad(dst, (0, E_pad - E), constant_values=N_pad).reshape(E_pad, 1)
    ew_p = jnp.pad(ew, ((0, E_pad - E), (0, 0)))

    node_spec = pl.BlockSpec((tN, D_pad), lambda i: (i, 0))

    # ---- kernel 0: fused QKV projection (node-parallel) ----
    q, kv = pl.pallas_call(
        functools.partial(qkv_kernel, d_pad=D_pad, mxu_dtype=mxu_dtype),
        out_shape=(jax.ShapeDtypeStruct((N_pad, D_pad), mxu_dtype),
                   jax.ShapeDtypeStruct((N_pad, 2 * D_pad), mxu_dtype)),
        grid=(n_grid,),
        in_specs=[node_spec,
                  pl.BlockSpec((D_pad, 3 * D_pad), lambda i: (0, 0))],
        out_specs=(pl.BlockSpec((tN, D_pad), lambda i: (i, 0)),
                   pl.BlockSpec((tN, 2 * D_pad), lambda i: (i, 0))),
        compiler_params=pltpu.CompilerParams(
            dimension_semantics=("parallel",),
            vmem_limit_bytes=vmem_bytes),
    )(x_p, w_qkv)

    # ---- kernel 1: edge attention aggregation (parallel partitions x edge tiles) ----
    edge_col = pl.BlockSpec((tE, 1), lambda p, e: (p * n_e_tiles + e, 0))
    attn_parts = pl.pallas_call(
        functools.partial(edge_attn_kernel, mxu_dtype=mxu_dtype),
        out_shape=jax.ShapeDtypeStruct((E_PAR, N_pad, D_pad), f32),
        grid=(E_PAR, n_e_tiles),
        in_specs=[edge_col, edge_col, edge_col,
                  pl.BlockSpec((N_pad, D_pad), lambda p, e: (0, 0)),       # Q (resident)
                  pl.BlockSpec((N_pad, 2 * D_pad), lambda p, e: (0, 0)),   # KV (resident)
                  pl.BlockSpec((D_pad, D_pad), lambda p, e: (0, 0))],      # head_block
        out_specs=pl.BlockSpec((1, N_pad, D_pad), lambda p, e: (p, 0, 0)),
        compiler_params=pltpu.CompilerParams(
            dimension_semantics=("parallel", "arbitrary"),
            vmem_limit_bytes=vmem_bytes),
    )(src_p, dst_p, ew_p, q, kv, head_block)

    # ---- kernel 2: partial-sum + inv_deg + w_o + LN1 + FFN + LN2 (node-parallel) ----
    def c1(r, c):
        return pl.BlockSpec((r, c), lambda i: (0, 0))

    out = pl.pallas_call(
        functools.partial(node_epilogue_kernel, eps=eps, d_model=d_model,
                          mxu_dtype=mxu_dtype),
        out_shape=jax.ShapeDtypeStruct((N_pad, D_pad), f32),
        grid=(n_grid,),
        in_specs=[node_spec,
                  pl.BlockSpec((E_PAR, tN, D_pad), lambda i: (0, i, 0)),
                  pl.BlockSpec((tN, 1), lambda i: (i, 0)),
                  c1(D_pad, D_pad), c1(1, D_pad),
                  c1(D_pad, F_pad), c1(1, F_pad),
                  c1(F_pad, D_pad), c1(1, D_pad),
                  c1(1, D_pad), c1(1, D_pad),
                  c1(1, D_pad), c1(1, D_pad)],
        out_specs=node_spec,
        compiler_params=pltpu.CompilerParams(
            dimension_semantics=("parallel",),
            vmem_limit_bytes=vmem_bytes),
    )(x_p, attn_parts, inv_deg_p,
      wo, bo, w1, b1, w2, b2, g1, bt1, g2, bt2)

    return out[:N, :d_model]


# ---------------- pure-JAX reference (mirrors the PyTorch forward) ----------------
def reference_forward(x, edge_index, edge_attr, params, *, n_heads):
    N, d_model = x.shape
    d_head = d_model // n_heads
    scale = 1.0 / math.sqrt(d_head)
    eps = 1e-5
    src, dst = edge_index[0], edge_index[1]

    Q = (x @ params["wq"]).reshape(N, n_heads, d_head)
    K = (x @ params["wk"]).reshape(N, n_heads, d_head)
    V = (x @ params["wv"]).reshape(N, n_heads, d_head)
    q_i, k_j, v_j = Q[src], K[dst], V[dst]
    scores = (q_i * k_j).sum(-1) * scale                         # (E, H)
    ew = jax.nn.sigmoid(edge_attr.sum(-1, keepdims=True))
    scores = scores * ew
    msg = v_j * scores[..., None]                                # (E, H, dh)
    out_sum = jnp.zeros((N, n_heads, d_head)).at[dst].add(msg)
    cnt = jnp.zeros((N,)).at[dst].add(1.0)
    out = out_sum / jnp.maximum(cnt, 1.0)[:, None, None]
    attn = out.reshape(N, d_model) @ params["wo"] + params["bo"][0]

    def ln(v, g, b):
        mu = v.mean(-1, keepdims=True)
        var = ((v - mu) ** 2).mean(-1, keepdims=True)
        return (v - mu) / jnp.sqrt(var + eps) * g[0] + b[0]

    h = ln(x + attn, params["g1"], params["bt1"])
    ff = jnp.maximum(h @ params["w1"] + params["b1"][0], 0.0) @ params["w2"] + params["b2"][0]
    return ln(h + ff, params["g2"], params["bt2"])


def init_params(key, d_model, d_ff):
    ks = jax.random.split(key, 8)

    def lin(k, fan_in, fan_out):
        a = 1.0 / math.sqrt(fan_in)
        return jax.random.uniform(k, (fan_in, fan_out), jnp.float32, -a, a)

    return {
        "wq": lin(ks[0], d_model, d_model),
        "wk": lin(ks[1], d_model, d_model),
        "wv": lin(ks[2], d_model, d_model),
        "wo": lin(ks[3], d_model, d_model),
        "bo": jax.random.uniform(ks[4], (1, d_model), jnp.float32, -0.1, 0.1),
        "w1": lin(ks[5], d_model, d_ff),
        "b1": jnp.zeros((1, d_ff), jnp.float32),
        "w2": lin(ks[6], d_ff, d_model),
        "b2": jax.random.uniform(ks[7], (1, d_model), jnp.float32, -0.1, 0.1),
        "g1": jnp.ones((1, d_model), jnp.float32),
        "bt1": jnp.zeros((1, d_model), jnp.float32),
        "g2": jnp.ones((1, d_model), jnp.float32),
        "bt2": jnp.zeros((1, d_model), jnp.float32),
    }


if __name__ == "__main__":
    N, d_model, n_heads, d_ff = 8, 32, 4, 64
    E, d_edge = 16, 8

    key = jax.random.PRNGKey(0)
    kx, ke, ks, kd, kp = jax.random.split(key, 5)
    x = jax.random.normal(kx, (N, d_model), jnp.float32)
    src = jax.random.randint(ks, (E,), 0, N)
    dst = jax.random.randint(kd, (E,), 0, N)
    edge_index = jnp.stack([src, dst], axis=0)            # (2, E)
    edge_attr = jax.random.normal(ke, (E, d_edge), jnp.float32)
    params = init_params(kp, d_model, d_ff)

    out = graph_transformer_layer(x, edge_index, edge_attr, params, n_heads=n_heads)
    out = jax.block_until_ready(out)

    ref = reference_forward(x, edge_index, edge_attr, params, n_heads=n_heads)
    assert out.shape == (N, d_model)
    assert jnp.allclose(out, ref, atol=1e-4, rtol=1e-4), (
        f"max abs err {jnp.max(jnp.abs(out - ref))}")

    print("KERNEL_OK")
</pallas_src>

<mosaic_0001>
module attributes {stable_mosaic.version = 11 : i64} {
  func.func @qkv_kernel(%arg0: i32, %arg1: memref<8x128xf32, #tpu.memory_space<vmem>>, %arg2: memref<128x384xf32, #tpu.memory_space<vmem>>, %arg3: memref<8x128xf32, #tpu.memory_space<vmem>>, %arg4: memref<8x256xf32, #tpu.memory_space<vmem>>) attributes {dimension_semantics = [#tpu.dimension_semantics<parallel>], iteration_bounds = array<i64: 1>, scalar_prefetch = 0 : i64, scratch_operands = 0 : i64, tpu.core_type = #tpu.core_type<tc>, window_params = [{transform_indices = @transform_0, window_bounds = array<i64: 8, 128>}, {pipeline_mode = #tpu.pipeline_mode<synchronous>, transform_indices = @transform_1, window_bounds = array<i64: 128, 384>}, {transform_indices = @transform_2, window_bounds = array<i64: 8, 128>}, {transform_indices = @transform_3, window_bounds = array<i64: 8, 256>}]} {
    %c0 = arith.constant 0 : index
    %c0_0 = arith.constant 0 : index
    %0 = vector.load %arg1[%c0, %c0_0] : memref<8x128xf32, #tpu.memory_space<vmem>>, vector<8x128xf32>
    %c0_1 = arith.constant 0 : index
    %c0_2 = arith.constant 0 : index
    %1 = vector.load %arg2[%c0_1, %c0_2] : memref<128x384xf32, #tpu.memory_space<vmem>>, vector<128x384xf32>
    %cst = arith.constant dense<0.000000e+00> : vector<8x384xf32>
    %2 = tpu.matmul %0, %1, %cst {dimension_numbers = #tpu.dot_dimension_numbers<[1], [0], [0], [1], [0, 0, 1, 1], [], []>} : vector<8x128xf32>, vector<128x384xf32>, vector<8x384xf32> -> vector<8x384xf32>
    %3 = vector.extract_strided_slice %2 {offsets = [0, 0], sizes = [8, 128], strides = [1, 1]} : vector<8x384xf32> to vector<8x128xf32>
    %c0_3 = arith.constant 0 : index
    %c0_4 = arith.constant 0 : index
    %4 = vector.load %arg3[%c0_3, %c0_4] : memref<8x128xf32, #tpu.memory_space<vmem>>, vector<8x128xf32>
    tpu.vector_store %arg3[%c0_3, %c0_4], %3 {strides = array<i32>} : memref<8x128xf32, #tpu.memory_space<vmem>>, vector<8x128xf32>,
    %5 = vector.extract_strided_slice %2 {offsets = [0, 128], sizes = [8, 256], strides = [1, 1]} : vector<8x384xf32> to vector<8x256xf32>
    %c0_5 = arith.constant 0 : index
    %c0_6 = arith.constant 0 : index
    %6 = vector.load %arg4[%c0_5, %c0_6] : memref<8x256xf32, #tpu.memory_space<vmem>>, vector<8x256xf32>
    tpu.vector_store %arg4[%c0_5, %c0_6], %5 {strides = array<i32>} : memref<8x256xf32, #tpu.memory_space<vmem>>, vector<8x256xf32>,
    return
  }
  func.func @transform_0(%arg0: i32) -> (i32, i32) {
    %c0_i32 = arith.constant 0 : i32
    %c0_i32_0 = arith.constant 0 : i32
    return %arg0, %c0_i32 : i32, i32
  }
  func.func @transform_1(%arg0: i32) -> (i32, i32) {
    %c0_i32 = arith.constant 0 : i32
    %c0_i32_0 = arith.constant 0 : i32
    %c0_i32_1 = arith.constant 0 : i32
    return %c0_i32, %c0_i32_0 : i32, i32
  }
  func.func @transform_2(%arg0: i32) -> (i32, i32) {
    %c0_i32 = arith.constant 0 : i32
    %c0_i32_0 = arith.constant 0 : i32
    return %arg0, %c0_i32 : i32, i32
  }
  func.func @transform_3(%arg0: i32) -> (i32, i32) {
    %c0_i32 = arith.constant 0 : i32
    %c0_i32_0 = arith.constant 0 : i32
    return %arg0, %c0_i32 : i32, i32
  }
}

</mosaic_0001>

<llo_original>
// kernel: tpu_custom_call.1
$region0: #{tpu_custom_call.1}
  #allocation0 [shape = 'u32[]', space=smem, size = 0x4, offset = 0x4, fixed_abs, tag = 'smem constant byte address 0x4 - core index']
  #allocation1 [shape = 'u32[144,128]{1,0:T(1,128)}', space=vmem, size = 0x12000, scoped, tag = 'internal scratch']
  %s0 = inlined_call_operand.hbm [shape: f32[8,128], index: 0, kind: input, shape index: {}]
  %s1 = inlined_call_operand.hbm [shape: f32[128,384], index: 1, kind: input, shape index: {}]
  %s2 = inlined_call_operand.hbm [shape: f32[8,128], index: 2, kind: output, shape index: {0}]
  %s3 = inlined_call_operand.hbm [shape: f32[8,256], index: 3, kind: output, shape index: {1}]
  %4 = xla_tuple %s2, %s3
  %s5 = sld [smem:[#allocation0]]
  $region34: #{tpu_custom_call.1} parent=0
    _
  %s7 = ssub.s32 1, %s5
  %s8 = scalar_select 0, %s7, %s5
  $region1: #{tpu_custom_call.1} parent=0
    #allocation2 [shape = 'u8[4096]{0}', space=vmem, size = 0x1000, scoped, tag = 'input window, operand 0, single buffered']
    #allocation3 [shape = 's32[1]{0}', space=sflag, size = 0x4, scoped, tag = 'scoped memory for tpu_custom_call.1']
    #allocation4 [shape = 's32[1]{0}', space=sflag, size = 0x4, scoped, tag = 'scoped memory for tpu_custom_call.1']
    #allocation5 [shape = 'u8[196608]{0}', space=vmem, size = 0x30000, scoped, tag = 'input window, operand 1, single buffered']
    #allocation6 [shape = 's32[1]{0}', space=sflag, size = 0x4, scoped, tag = 'scoped memory for tpu_custom_call.1']
    #allocation7 [shape = 'u8[4096]{0}', space=vmem, size = 0x1000, scoped, tag = 'output window, operand 0, single buffered']
    #allocation8 [shape = 'u8[8192]{0}', space=vmem, size = 0x2000, scoped, tag = 'output window, operand 1, single buffered']
    #allocation9 [shape = 's32[1]{0}', space=sflag, size = 0x4, scoped, tag = 'scoped memory for tpu_custom_call.1']
    %9 = vsyncpa [#allocation3], 0
    %10 = vsyncpa [#allocation6], 0
    %11 = vsyncpa [#allocation4], 0
    %12 = vsyncpa [#allocation9], 0
    // Predicated region
    $region2: #{tpu_custom_call.1} parent=1 // pred_check
      _
    $region3: #{tpu_custom_call.1} parent=1 // pred_check_branch
      %14 = sbr.rel (0) target = $region5
    $region4: #{tpu_custom_call.1} parent=1 // pred_region
      %s16 = ssub.s32 128, 128
      %17 = vsyncadd [#allocation3], %s16
      %s19 = sshll.u32 [#allocation2], 4
      %s20 = int_to_ptr.vmem [resolvable:$true] %s19
      %22 = dma.hbm_to_vmem [thread:$0]  %s0, 128, %s20, [#allocation3]
    $region5: #{tpu_custom_call.1} parent=1 // pred_fallthru
      _
    // Predicated region
    $region6: #{tpu_custom_call.1} parent=1 // pred_check
      _
    $region7: #{tpu_custom_call.1} parent=1 // pred_check_branch
      %24 = sbr.rel (0) target = $region9
    $region8: #{tpu_custom_call.1} parent=1 // pred_region
      %s26 = ssub.s32 6144, 6144
      %27 = vsyncadd [#allocation6], %s26
      %s28 = sshll.u32 [#allocation5], 4
      %s29 = int_to_ptr.vmem [resolvable:$true] %s28
      %34 = dma.hbm_to_vmem [thread:$0]  %s1, 6144, %s29, [#allocation6], 384, 384, 24
    $region9: #{tpu_custom_call.1} parent=1 // pred_fallthru
      _
    // Predicated region
    $region10: #{tpu_custom_call.1} parent=1 // pred_check
      _
    $region11: #{tpu_custom_call.1} parent=1 // pred_check_branch
      %36 = sbr.rel (0) target = $region13
    $region12: #{tpu_custom_call.1} parent=1 // pred_region
      %37 = dma.done [#allocation3], 128
    $region13: #{tpu_custom_call.1} parent=1 // pred_fallthru
      _
    // Predicated region
    $region14: #{tpu_custom_call.1} parent=1 // pred_check
      _
    $region15: #{tpu_custom_call.1} parent=1 // pred_check_branch
      %39 = sbr.rel (0) target = $region17
    $region16: #{tpu_custom_call.1} parent=1 // pred_region
      %40 = dma.done [#allocation6], 6144
    $region17: #{tpu_custom_call.1} parent=1 // pred_fallthru
      _
    %v41 = vld [vmem:[#allocation2] sm:$0xff]
    %v42 = vld [vmem:[#allocation5] sm:$0xff]
    %v43 = vld [vmem:[#allocation5 + $0x8] sm:$0xff]
    %v44 = vld [vmem:[#allocation5 + $0x10] sm:$0xff]
    %v45 = vld [vmem:[#allocation5 + $0x18] sm:$0xff]
    %v46 = vld [vmem:[#allocation5 + $0x20] sm:$0xff]
    %v47 = vld [vmem:[#allocation5 + $0x28] sm:$0xff]
    %v48 = vld [vmem:[#allocation5 + $0x30] sm:$0xff]
    %v49 = vld [vmem:[#allocation5 + $0x38] sm:$0xff]
    %v50 = vld [vmem:[#allocation5 + $0x40] sm:$0xff]
    %v51 = vld [vmem:[#allocation5 + $0x48] sm:$0xff]
    %v52 = vld [vmem:[#allocation5 + $0x50] sm:$0xff]
    %v53 = vld [vmem:[#allocation5 + $0x58] sm:$0xff]
    %v54 = vld [vmem:[#allocation5 + $0x60] sm:$0xff]
    %v55 = vld [vmem:[#allocation5 + $0x68] sm:$0xff]
    %v56 = vld [vmem:[#allocation5 + $0x70] sm:$0xff]
    %v57 = vld [vmem:[#allocation5 + $0x78] sm:$0xff]
    %v58 = vld [vmem:[#allocation5 + $0x80] sm:$0xff]
    %v59 = vld [vmem:[#allocation5 + $0x88] sm:$0xff]
    %v60 = vld [vmem:[#allocation5 + $0x90] sm:$0xff]
    %v61 = vld [vmem:[#allocation5 + $0x98] sm:$0xff]
    %v62 = vld [vmem:[#allocation5 + $0xa0] sm:$0xff]
    %v63 = vld [vmem:[#allocation5 + $0xa8] sm:$0xff]
    %v64 = vld [vmem:[#allocation5 + $0xb0] sm:$0xff]
    %v65 = vld [vmem:[#allocation5 + $0xb8] sm:$0xff]
    %v66 = vld [vmem:[#allocation5 + $0xc0] sm:$0xff]
    %v67 = vld [vmem:[#allocation5 + $0xc8] sm:$0xff]
    %v68 = vld [vmem:[#allocation5 + $0xd0] sm:$0xff]
    %v69 = vld [vmem:[#allocation5 + $0xd8] sm:$0xff]
    %v70 = vld [vmem:[#allocation5 + $0xe0] sm:$0xff]
    %v71 = vld [vmem:[#allocation5 + $0xe8] sm:$0xff]
    %v72 = vld [vmem:[#allocation5 + $0xf0] sm:$0xff]
    %v73 = vld [vmem:[#allocation5 + $0xf8] sm:$0xff]
    %v74 = vld [vmem:[#allocation5 + $0x100] sm:$0xff]
    %v75 = vld [vmem:[#allocation5 + $0x108] sm:$0xff]
    %v76 = vld [vmem:[#allocation5 + $0x110] sm:$0xff]
    %v77 = vld [vmem:[#allocation5 + $0x118] sm:$0xff]
    %v78 = vld [vmem:[#allocation5 + $0x120] sm:$0xff]
    %v79 = vld [vmem:[#allocation5 + $0x128] sm:$0xff]
    %v80 = vld [vmem:[#allocation5 + $0x130] sm:$0xff]
    %v81 = vld [vmem:[#allocation5 + $0x138] sm:$0xff]
    %v82 = vld [vmem:[#allocation5 + $0x140] sm:$0xff]
    %v83 = vld [vmem:[#allocation5 + $0x148] sm:$0xff]
    %v84 = vld [vmem:[#allocation5 + $0x150] sm:$0xff]
    %v85 = vld [vmem:[#allocation5 + $0x158] sm:$0xff]
    %v86 = vld [vmem:[#allocation5 + $0x160] sm:$0xff]
    %v87 = vld [vmem:[#allocation5 + $0x168] sm:$0xff]
    %v88 = vld [vmem:[#allocation5 + $0x170] sm:$0xff]
    %v89 = vld [vmem:[#allocation5 + $0x178] sm:$0xff]
    %90 = vmatprep.subr.mxu0 %v43
    %91 = vmatpush1.msra.mxu0 %v42
    %92 = vmatprep.subr.mxu0 %v46
    %93 = vmatpush1.msra.mxu0 %v45
    %94 = vmatprep.subr.mxu0 %v49
    %95 = vmatpush1.msra.mxu0 %v48
    %96 = vmatprep.subr.mxu0 %v52
    %97 = vmatpush1.msra.mxu0 %v51
    %98 = vmatprep.subr.mxu0 %v55
    %99 = vmatpush1.msra.mxu0 %v54
    %100 = vmatprep.subr.mxu0 %v58
    %101 = vmatpush1.msra.mxu0 %v57
    %102 = vmatprep.subr.mxu0 %v61
    %103 = vmatpush1.msra.mxu0 %v60
    %104 = vmatprep.subr.mxu0 %v64
    %105 = vmatpush1.msra.mxu0 %v63
    %106 = vmatprep.subr.mxu0 %v67
    %107 = vmatpush1.msra.mxu0 %v66
    %108 = vmatprep.subr.mxu0 %v70
    %109 = vmatpush1.msra.mxu0 %v69
    %110 = vmatprep.subr.mxu0 %v73
    %111 = vmatpush1.msra.mxu0 %v72
    %112 = vmatprep.subr.mxu0 %v76
    %113 = vmatpush1.msra.mxu0 %v75
    %114 = vmatprep.subr.mxu0 %v79
    %115 = vmatpush1.msra.mxu0 %v78
    %116 = vmatprep.subr.mxu0 %v82
    %117 = vmatpush1.msra.mxu0 %v81
    %118 = vmatprep.subr.mxu0 %v85
    %119 = vmatpush1.msra.mxu0 %v84
    %120 = vmatprep.subr.mxu0 %v88
    %121 = vmatpush1.msra.mxu0 %v87
    %122 = vmatprep.subr.mxu0 0.0
    %123 = vmatpush1.msra.mxu0 0.0
    %124 = vmatprep.subr.mxu0 0.0
    %125 = vmatpush1.msra.mxu0 0.0
    %126 = vmatprep.subr.mxu0 0.0
    %127 = vmatpush1.msra.mxu0 0.0
    %128 = vmatprep.subr.mxu0 0.0
    %129 = vmatpush1.msra.mxu0 0.0
    %130 = vmatprep.subr.mxu0 0.0
    %131 = vmatpush1.msra.mxu0 0.0
    %132 = vmatprep.subr.mxu0 0.0
    %133 = vmatpush1.msra.mxu0 0.0
    %134 = vmatprep.subr.mxu0 0.0
    %135 = vmatpush1.msra.mxu0 0.0
    %136 = vmatprep.subr.mxu0 0.0
    %137 = vmatpush1.msra.mxu0 0.0
    %138 = vmatprep.subr.mxu0 0.0
    %139 = vmatpush1.msra.mxu0 0.0
    %140 = vmatprep.subr.mxu0 0.0
    %141 = vmatpush1.msra.mxu0 0.0
    %142 = vmatprep.subr.mxu0 0.0
    %143 = vmatpush1.msra.mxu0 0.0
    %144 = vmatprep.subr.mxu0 0.0
    %145 = vmatpush1.msra.mxu0 0.0
    %146 = vmatprep.subr.mxu0 0.0
    %147 = vmatpush1.msra.mxu0 0.0
    %148 = vmatprep.subr.mxu0 0.0
    %149 = vmatpush1.msra.mxu0 0.0
    %150 = vmatprep.subr.mxu0 0.0
    %151 = vmatpush1.msra.mxu0 0.0
    %152 = vmatprep.subr.mxu0 0.0
    %153 = vmatpush1.msra.mxu0 0.0
    %154 = vmatprep.mubr.f32.mxu0 0.0
    %155 = vmatmul.mubr.f32.gmra.mrb[0].mxu0 %v41
    %v156 = vpop.f32.mrb[0].mxu0
    %v157 = vadd.f32 0.0, %v156
    %v158 = vpop.f32.mrb[0].mxu0
    %v159 = vadd.f32 0.0, %v158
    %160 = vdwg.mxu0
    %161 = vmatprep.subr.mxu0 0.0
    %162 = vmatpush1.msra.mxu0 %v44
    %163 = vmatprep.subr.mxu0 0.0
    %164 = vmatpush1.msra.mxu0 %v47
    %165 = vmatprep.subr.mxu0 0.0
    %166 = vmatpush1.msra.mxu0 %v50
    %167 = vmatprep.subr.mxu0 0.0
    %168 = vmatpush1.msra.mxu0 %v53
    %169 = vmatprep.subr.mxu0 0.0
    %170 = vmatpush1.msra.mxu0 %v56
    %171 = vmatprep.subr.mxu0 0.0
    %172 = vmatpush1.msra.mxu0 %v59
    %173 = vmatprep.subr.mxu0 0.0
    %174 = vmatpush1.msra.mxu0 %v62
    %175 = vmatprep.subr.mxu0 0.0
    %176 = vmatpush1.msra.mxu0 %v65
    %177 = vmatprep.subr.mxu0 0.0
    %178 = vmatpush1.msra.mxu0 %v68
    %179 = vmatprep.subr.mxu0 0.0
    %180 = vmatpush1.msra.mxu0 %v71
    %181 = vmatprep.subr.mxu0 0.0
    %182 = vmatpush1.msra.mxu0 %v74
    %183 = vmatprep.subr.mxu0 0.0
    %184 = vmatpush1.msra.mxu0 %v77
    %185 = vmatprep.subr.mxu0 0.0
    %186 = vmatpush1.msra.mxu0 %v80
    %187 = vmatprep.subr.mxu0 0.0
    %188 = vmatpush1.msra.mxu0 %v83
    %189 = vmatprep.subr.mxu0 0.0
    %190 = vmatpush1.msra.mxu0 %v86
    %191 = vmatprep.subr.mxu0 0.0
    %192 = vmatpush1.msra.mxu0 %v89
    %193 = vmatprep.subr.mxu0 0.0
    %194 = vmatpush1.msra.mxu0 0.0
    %195 = vmatprep.subr.mxu0 0.0
    %196 = vmatpush1.msra.mxu0 0.0
    %197 = vmatprep.subr.mxu0 0.0
    %198 = vmatpush1.msra.mxu0 0.0
    %199 = vmatprep.subr.mxu0 0.0
    %200 = vmatpush1.msra.mxu0 0.0
    %201 = vmatprep.subr.mxu0 0.0
    %202 = vmatpush1.msra.mxu0 0.0
    %203 = vmatprep.subr.mxu0 0.0
    %204 = vmatpush1.msra.mxu0 0.0
    %205 = vmatprep.subr.mxu0 0.0
    %206 = vmatpush1.msra.mxu0 0.0
    %207 = vmatprep.subr.mxu0 0.0
    %208 = vmatpush1.msra.mxu0 0.0
    %209 = vmatprep.subr.mxu0 0.0
    %210 = vmatpush1.msra.mxu0 0.0
    %211 = vmatprep.subr.mxu0 0.0
    %212 = vmatpush1.msra.mxu0 0.0
    %213 = vmatprep.subr.mxu0 0.0
    %214 = vmatpush1.msra.mxu0 0.0
    %215 = vmatprep.subr.mxu0 0.0
    %216 = vmatpush1.msra.mxu0 0.0
    %217 = vmatprep.subr.mxu0 0.0
    %218 = vmatpush1.msra.mxu0 0.0
    %219 = vmatprep.subr.mxu0 0.0
    %220 = vmatpush1.msra.mxu0 0.0
    %221 = vmatprep.subr.mxu0 0.0
    %222 = vmatpush1.msra.mxu0 0.0
    %223 = vmatprep.subr.mxu0 0.0
    %224 = vmatpush1.msra.mxu0 0.0
    %225 = vmatprep.mubr.f32.mxu0 0.0
    %226 = vmatmul.mubr.f32.gmra.mrb[0].mxu0 %v41
    %v227 = vpop.f32.mrb[0].mxu0
    %v228 = vadd.f32 0.0, %v227
    %v229 = vpop.f32.mrb[0].mxu0
    %230 = vdwg.mxu0
    %231 = vst [vmem:[#allocation7] sm:$0xff] %v157
    %232 = vst [vmem:[#allocation8] sm:$0xff] %v159
    %233 = vst [vmem:[#allocation8 + $0x8] sm:$0xff] %v228
    // Predicated region
    $region18: #{tpu_custom_call.1} parent=1 // pred_check
      _
    $region19: #{tpu_custom_call.1} parent=1 // pred_check_branch
      %235 = sbr.rel (0) target = $region21
    $region20: #{tpu_custom_call.1} parent=1 // pred_region
      %s237 = ssub.s32 128, 128
      %238 = vsyncadd [#allocation4], %s237
      %s240 = sshll.u32 [#allocation7], 4
      %s241 = int_to_ptr.vmem [resolvable:$true] %s240
      %243 = dma.vmem_to_hbm [thread:$0]  %s241, 128, %s2, [#allocation4]
    $region21: #{tpu_custom_call.1} parent=1 // pred_fallthru
      _
    // Predicated region
    $region22: #{tpu_custom_call.1} parent=1 // pred_check
      _
    $region23: #{tpu_custom_call.1} parent=1 // pred_check_branch
      %245 = sbr.rel (0) target = $region25
    $region24: #{tpu_custom_call.1} parent=1 // pred_region
      %s247 = ssub.s32 256, 256
      %248 = vsyncadd [#allocation9], %s247
      %s250 = sshll.u32 [#allocation8], 4
      %s251 = int_to_ptr.vmem [resolvable:$true] %s250
      %253 = dma.vmem_to_hbm [thread:$0]  %s251, 256, %s3, [#allocation9]
    $region25: #{tpu_custom_call.1} parent=1 // pred_fallthru
      _
    // Predicated region
    $region26: #{tpu_custom_call.1} parent=1 // pred_check
      _
    $region27: #{tpu_custom_call.1} parent=1 // pred_check_branch
      %255 = sbr.rel (0) target = $region29
    $region28: #{tpu_custom_call.1} parent=1 // pred_region
      %256 = dma.done [#allocation4], 128
    $region29: #{tpu_custom_call.1} parent=1 // pred_fallthru
      _
    // Predicated region
    $region30: #{tpu_custom_call.1} parent=1 // pred_check
      _
    $region31: #{tpu_custom_call.1} parent=1 // pred_check_branch
      %258 = sbr.rel (0) target = $region33
    $region32: #{tpu_custom_call.1} parent=1 // pred_region
      %259 = dma.done [#allocation9], 256
    $region33: #{tpu_custom_call.1} parent=1 // pred_fallthru
      _
    %260 = vsyncpa [#allocation3], 1
    %261 = vsyncpa [#allocation6], 1
    %262 = vsyncpa [#allocation4], 1
    %263 = vsyncpa [#allocation9], 1

</llo_original>
